<compile_context>
chip_gen: v7x
topology: tpu7x:2x2x1
jax: 0.10.0
libtpu: 0.0.40
codegen_flags: <defaults>
</compile_context>

<pallas_src>
import functools

import jax
import jax.numpy as jnp
from jax.experimental import pallas as pl
from jax.experimental.pallas import tpu as pltpu


def _sepconv_kernel(x_ref, wdw_ref, shift_ref, wpw_ref, bias_ref, out_ref,
                    xpad_ref, *, H, W, rows, use_mxu):
    # x_ref:     (Cin, H*W)            resident per batch element (squeezed N)
    # wdw_ref:   (Cin, 9)              depthwise 3x3 weights, BN scale folded
    # shift_ref: (Cin, 1)              folded BN shift
    # wpw_ref:   (Cout, Cin)           pointwise 1x1 weights
    # bias_ref:  (Cout, 1)             pointwise bias
    # out_ref:   (Cout, rows*W)        current output row tile (squeezed N)
    # xpad_ref:  (R, Cin, PW_pad) f32  per-tile halo windows (scratch)
    Cin = x_ref.shape[0]
    Cout = out_ref.shape[0]
    R = xpad_ref.shape[0]
    PW_pad = xpad_ref.shape[2]
    TW = rows * W                 # flattened row-tile width (lane axis)
    PW = (rows + 2) * W           # valid lanes of one halo window
    r = pl.program_id(1)

    # ---- Build all R halo windows once per batch element (r == 0). --------
    # Window t holds image rows [t*rows - 1, t*rows + rows + 1); rows outside
    # the image and the lane padding are zero, so the 3x3 taps below need no
    # row masks at all.  All slices are static.
    @pl.when(r == 0)
    def _():
        for t in range(R):                       # static unroll
            lo = t * rows - 1
            src_lo = max(lo, 0)
            src_hi = min(lo + rows + 2, H)
            dst_lo = src_lo - lo                 # 1 only for the first tile
            n_rows = src_hi - src_lo
            if lo < 0:                           # zero top halo row
                xpad_ref[t, :, 0:W] = jnp.zeros((Cin, W), jnp.float32)
            if lo + rows + 2 > H:                # zero bottom halo row
                xpad_ref[t, :, (rows + 1) * W:PW] = jnp.zeros(
                    (Cin, W), jnp.float32)
            if PW_pad > PW:                      # zero lane padding
                xpad_ref[t, :, PW:PW_pad] = jnp.zeros(
                    (Cin, PW_pad - PW), jnp.float32)
            xpad_ref[t, :, dst_lo * W:(dst_lo + n_rows) * W] = (
                x_ref[:, src_lo * W:src_hi * W].astype(jnp.float32))

    win = xpad_ref[r]                            # (Cin, PW_pad), f32

    # ---- Hoisted column-edge masks (only dw = +-1 taps need them). --------
    col = jax.lax.broadcasted_iota(jnp.int32, (1, TW), 1) % W
    not_left = col != 0                          # valid positions for dw = -1
    not_right = col != (W - 1)                   # valid positions for dw = +1

    # ---- Depthwise 3x3, stride 1, padding 1 (BN scale pre-folded). --------
    # Tap (dh, dw) of output position p reads win[p + (1+dh)*W + dw]; rolls
    # are static over a 128-aligned lane axis and any wrap-around lands only
    # on column-masked positions.
    wdw = wdw_ref[...]                           # hoist weight load
    acc = jnp.zeros((Cin, TW), jnp.float32)
    k = 0
    for dh in (-1, 0, 1):
        for dw in (-1, 0, 1):
            s = (1 + dh) * W + dw
            tap = pltpu.roll(win, shift=(-s) % PW_pad, axis=1)[:, :TW]
            if dw == -1:
                tap = jnp.where(not_left, tap, 0.0)
            elif dw == 1:
                tap = jnp.where(not_right, tap, 0.0)
            acc = acc + tap * wdw[:, k:k + 1]    # (Cin,1) lane-broadcast FMA
            k += 1

    # ---- BatchNorm shift (scale already folded into wdw) + ReLU. ----------
    y = jnp.maximum(acc + shift_ref[...], 0.0)   # (Cin, TW)

    # ---- Pointwise 1x1 conv. ----------------------------------------------
    if use_mxu:
        # Channel mixing on the MXU, f32 accumulation.
        out = jnp.dot(wpw_ref[...], y, preferred_element_type=jnp.float32)
        out = out + bias_ref[...]
    else:
        # Tiny Cin/Cout (e.g. 4x8): MXU would be mostly padding, keep on VPU.
        wpw = wpw_ref[...]
        out = jnp.broadcast_to(bias_ref[...], (Cout, TW)).astype(jnp.float32)
        for ci in range(Cin):
            out = out + wpw[:, ci:ci + 1] * y[ci:ci + 1, :]
    out_ref[...] = out.astype(out_ref.dtype)     # full-width, lane-dense store


def _pick_row_tile(H, W, max_tw=2048):
    """Largest divisor `rows` of H with rows*W a multiple of 128, rows*W <=
    max_tw, and at least 2 row tiles (pipeline depth / v7x 2-TC headroom).
    Falls back to the full image (R = 1, block last dim == full array dim)."""
    best = None
    for rows in range(1, H + 1):
        if H % rows:
            continue
        if (rows * W) % 128 != 0 or rows * W > max_tw:
            continue
        if H // rows < 2:
            continue
        best = rows
    return best if best is not None else H


@jax.jit
def separable_conv(x_nchw, w_dw, gamma, beta, run_mean, run_var, w_pw, b_pw,
                   eps=1e-5):
    """x_nchw: (N, Cin, H, W) -> (N, Cout, H, W).  Inference-mode BN."""
    N, Cin, H, W = x_nchw.shape
    Cout = w_pw.shape[0]
    HW = H * W

    rows = _pick_row_tile(H, W)
    R = H // rows
    TW = rows * W
    PW = (rows + 2) * W
    PW_pad = ((PW + 127) // 128) * 128

    # Free (contiguous) reshape: keep NCHW, flatten H*W onto the lane axis.
    x_flat = x_nchw.reshape(N, Cin, HW)

    # Fold BN (inference) scale into the depthwise weights; keep the shift.
    scale = gamma * jax.lax.rsqrt(run_var + eps)                      # (Cin,)
    wdw = (w_dw[:, 0, :, :].reshape(Cin, 9) * scale[:, None]).astype(jnp.float32)
    shift = (beta - run_mean * scale).reshape(Cin, 1).astype(jnp.float32)

    # Pointwise weights (Cout, Cin, 1, 1) -> (Cout, Cin); bias -> (Cout, 1).
    wpw = w_pw[:, :, 0, 0].astype(jnp.float32)
    bias = b_pw.reshape(Cout, 1).astype(jnp.float32)

    # Route channel mixing to the MXU except for tiny channel counts.
    use_mxu = (Cin * Cout) >= 1024

    # Explicit VMEM budget: double-buffered resident input block, halo-window
    # scratch, double-buffered output tiles, weights.  Cap at 48 MiB so it is
    # safe on v7x (64 MiB physical) as well as v5e/v6e (128 MiB).
    itemsize = jnp.dtype(x_nchw.dtype).itemsize
    est = (2 * Cin * HW * itemsize + R * Cin * PW_pad * 4
           + 2 * Cout * TW * itemsize
           + 4 * (Cin * 9 + Cin + Cout * Cin + Cout))
    vmem_limit = int(min(48 * 2 ** 20, max(16 * 2 ** 20, 2 * est)))

    kernel = functools.partial(_sepconv_kernel, H=H, W=W, rows=rows,
                               use_mxu=use_mxu)
    out_flat = pl.pallas_call(
        kernel,
        out_shape=jax.ShapeDtypeStruct((N, Cout, HW), x_nchw.dtype),
        grid_spec=pltpu.PrefetchScalarGridSpec(
            num_scalar_prefetch=0,
            grid=(N, R),            # batch (parallel) x row tiles (arbitrary)
            in_specs=[
                # Input resident across the row axis: fetched once per n.
                pl.BlockSpec((pl.Squeezed(), Cin, HW), lambda n, r: (n, 0, 0)),
                pl.BlockSpec((Cin, 9), lambda n, r: (0, 0)),
                pl.BlockSpec((Cin, 1), lambda n, r: (0, 0)),
                pl.BlockSpec((Cout, Cin), lambda n, r: (0, 0)),
                pl.BlockSpec((Cout, 1), lambda n, r: (0, 0)),
            ],
            out_specs=pl.BlockSpec((pl.Squeezed(), Cout, TW),
                                   lambda n, r: (n, 0, r)),
            scratch_shapes=[pltpu.VMEM((R, Cin, PW_pad), jnp.float32)],
        ),
        compiler_params=pltpu.CompilerParams(
            dimension_semantics=("parallel", "arbitrary"),
            vmem_limit_bytes=vmem_limit),
    )(x_flat, wdw, shift, wpw, bias)

    return out_flat.reshape(N, Cout, H, W)


def _reference(x, w_dw, gamma, beta, mean, var, w_pw, b_pw, eps=1e-5):
    """Pure-JAX reference (inference-mode BN) for the correctness check."""
    Cin = x.shape[1]
    dw = jax.lax.conv_general_dilated(
        x, w_dw, window_strides=(1, 1), padding=((1, 1), (1, 1)),
        dimension_numbers=("NCHW", "OIHW", "NCHW"),
        feature_group_count=Cin, precision=jax.lax.Precision.HIGHEST)
    scale = gamma * jax.lax.rsqrt(var + eps)
    y = dw * scale[None, :, None, None] + (beta - mean * scale)[None, :, None, None]
    y = jnp.maximum(y, 0.0)
    pw = jax.lax.conv_general_dilated(
        y, w_pw, window_strides=(1, 1), padding=((0, 0), (0, 0)),
        dimension_numbers=("NCHW", "OIHW", "NCHW"),
        precision=jax.lax.Precision.HIGHEST)
    return pw + b_pw[None, :, None, None]


if __name__ == "__main__":
    # Small shapes consistent with the module: inp=4, oup=8, 16x16 spatial.
    N, Cin, Cout, H, W = 2, 4, 8, 16, 16

    key = jax.random.PRNGKey(0)
    kx, k1, k2, k3, k4, k5, k6 = jax.random.split(key, 7)

    x = jax.random.normal(kx, (N, Cin, H, W), dtype=jnp.float32)

    # Deterministic parameter init (shapes follow the PyTorch module).
    w_dw = 0.1 * jax.random.normal(k1, (Cin, 1, 3, 3), dtype=jnp.float32)
    gamma = 1.0 + 0.1 * jax.random.normal(k2, (Cin,), dtype=jnp.float32)
    beta = 0.1 * jax.random.normal(k3, (Cin,), dtype=jnp.float32)
    run_mean = 0.1 * jax.random.normal(k4, (Cin,), dtype=jnp.float32)
    run_var = jnp.abs(1.0 + 0.1 * jax.random.normal(k5, (Cin,),
                                                    dtype=jnp.float32))
    w_pw = 0.1 * jax.random.normal(k6, (Cout, Cin, 1, 1), dtype=jnp.float32)
    b_pw = jnp.linspace(-0.1, 0.1, Cout, dtype=jnp.float32)

    out = separable_conv(x, w_dw, gamma, beta, run_mean, run_var, w_pw, b_pw)
    jax.block_until_ready(out)
    assert out.shape == (N, Cout, H, W), out.shape

    ref = _reference(x, w_dw, gamma, beta, run_mean, run_var, w_pw, b_pw)
    max_err = float(jnp.max(jnp.abs(out - ref)))
    assert jnp.allclose(out, ref, atol=1e-4, rtol=1e-4), max_err

    print("KERNEL_OK")
</pallas_src>

<mosaic_0001>
module attributes {stable_mosaic.version = 11 : i64} {
  func.func @_sepconv_kernel(%arg0: i32, %arg1: i32, %arg2: memref<1x4x256xf32, #tpu.memory_space<vmem>>, %arg3: memref<4x9xf32, #tpu.memory_space<vmem>>, %arg4: memref<4x1xf32, #tpu.memory_space<vmem>>, %arg5: memref<8x4xf32, #tpu.memory_space<vmem>>, %arg6: memref<8x1xf32, #tpu.memory_space<vmem>>, %arg7: memref<1x8x128xf32, #tpu.memory_space<vmem>>, %arg8: memref<2x4x256xf32, #tpu.memory_space<vmem>>) attributes {dimension_semantics = [#tpu.dimension_semantics<parallel>, #tpu.dimension_semantics<arbitrary>], iteration_bounds = array<i64: 2, 2>, scalar_prefetch = 0 : i64, scratch_operands = 1 : i64, tpu.core_type = #tpu.core_type<tc>, window_params = [{transform_indices = @transform_0, window_bounds = array<i64: 1, 4, 256>}, {pipeline_mode = #tpu.pipeline_mode<synchronous>, transform_indices = @transform_1, window_bounds = array<i64: 4, 9>}, {pipeline_mode = #tpu.pipeline_mode<synchronous>, transform_indices = @transform_2, window_bounds = array<i64: 4, 1>}, {pipeline_mode = #tpu.pipeline_mode<synchronous>, transform_indices = @transform_3, window_bounds = array<i64: 8, 4>}, {pipeline_mode = #tpu.pipeline_mode<synchronous>, transform_indices = @transform_4, window_bounds = array<i64: 8, 1>}, {transform_indices = @transform_5, window_bounds = array<i64: 1, 8, 128>}]} {
    %c0_i32 = arith.constant 0 : i32
    %0 = arith.cmpi eq, %arg1, %c0_i32 : i32
    %1 = arith.extui %0 : i1 to i32
    %c0_i32_0 = arith.constant 0 : i32
    %2 = arith.cmpi ne, %1, %c0_i32_0 : i32
    scf.if %2 {
      %cst_27 = arith.constant 0.000000e+00 : f32
      %143 = vector.broadcast %cst_27 : f32 to vector<4x16xf32>
      %c0_28 = arith.constant 0 : index
      %c0_29 = arith.constant 0 : index
      %c0_30 = arith.constant 0 : index
      %144 = vector.load %arg8[%c0_28, %c0_29, %c0_30] : memref<2x4x256xf32, #tpu.memory_space<vmem>>, vector<1x4x16xf32>
      %145 = vector.shape_cast %144 : vector<1x4x16xf32> to vector<4x16xf32>
      %146 = vector.shape_cast %143 : vector<4x16xf32> to vector<1x4x16xf32>
      tpu.vector_store %arg8[%c0_28, %c0_29, %c0_30], %146 {strides = array<i32>} : memref<2x4x256xf32, #tpu.memory_space<vmem>>, vector<1x4x16xf32>,
      %cst_31 = arith.constant 0.000000e+00 : f32
      %147 = vector.broadcast %cst_31 : f32 to vector<4x96xf32>
      %c0_32 = arith.constant 0 : index
      %c0_33 = arith.constant 0 : index
      %c160 = arith.constant 160 : index
      %148 = vector.load %arg8[%c0_32, %c0_33, %c160] : memref<2x4x256xf32, #tpu.memory_space<vmem>>, vector<1x4x96xf32>
      %149 = vector.shape_cast %148 : vector<1x4x96xf32> to vector<4x96xf32>
      %150 = vector.shape_cast %147 : vector<4x96xf32> to vector<1x4x96xf32>
      tpu.vector_store %arg8[%c0_32, %c0_33, %c160], %150 {strides = array<i32>} : memref<2x4x256xf32, #tpu.memory_space<vmem>>, vector<1x4x96xf32>,
      %c0_34 = arith.constant 0 : index
      %c0_35 = arith.constant 0 : index
      %c0_36 = arith.constant 0 : index
      %151 = vector.load %arg2[%c0_34, %c0_35, %c0_36] : memref<1x4x256xf32, #tpu.memory_space<vmem>>, vector<1x4x144xf32>
      %152 = vector.shape_cast %151 : vector<1x4x144xf32> to vector<4x144xf32>
      %c0_37 = arith.constant 0 : index
      %c0_38 = arith.constant 0 : index
      %c16 = arith.constant 16 : index
      %153 = vector.load %arg8[%c0_37, %c0_38, %c16] : memref<2x4x256xf32, #tpu.memory_space<vmem>>, vector<1x4x144xf32>
      %154 = vector.shape_cast %153 : vector<1x4x144xf32> to vector<4x144xf32>
      %155 = vector.shape_cast %152 : vector<4x144xf32> to vector<1x4x144xf32>
      tpu.vector_store %arg8[%c0_37, %c0_38, %c16], %155 {strides = array<i32>} : memref<2x4x256xf32, #tpu.memory_space<vmem>>, vector<1x4x144xf32>,
      %cst_39 = arith.constant 0.000000e+00 : f32
      %156 = vector.broadcast %cst_39 : f32 to vector<4x16xf32>
      %c1 = arith.constant 1 : index
      %c0_40 = arith.constant 0 : index
      %c144 = arith.constant 144 : index
      %157 = vector.load %arg8[%c1, %c0_40, %c144] : memref<2x4x256xf32, #tpu.memory_space<vmem>>, vector<1x4x16xf32>
      %158 = vector.shape_cast %157 : vector<1x4x16xf32> to vector<4x16xf32>
      %159 = vector.shape_cast %156 : vector<4x16xf32> to vector<1x4x16xf32>
      tpu.vector_store %arg8[%c1, %c0_40, %c144], %159 {strides = array<i32>} : memref<2x4x256xf32, #tpu.memory_space<vmem>>, vector<1x4x16xf32>,
      %cst_41 = arith.constant 0.000000e+00 : f32
      %160 = vector.broadcast %cst_41 : f32 to vector<4x96xf32>
      %c1_42 = arith.constant 1 : index
      %c0_43 = arith.constant 0 : index
      %c160_44 = arith.constant 160 : index
      %161 = vector.load %arg8[%c1_42, %c0_43, %c160_44] : memref<2x4x256xf32, #tpu.memory_space<vmem>>, vector<1x4x96xf32>
      %162 = vector.shape_cast %161 : vector<1x4x96xf32> to vector<4x96xf32>
      %163 = vector.shape_cast %160 : vector<4x96xf32> to vector<1x4x96xf32>
      tpu.vector_store %arg8[%c1_42, %c0_43, %c160_44], %163 {strides = array<i32>} : memref<2x4x256xf32, #tpu.memory_space<vmem>>, vector<1x4x96xf32>,
      %c0_45 = arith.constant 0 : index
      %c0_46 = arith.constant 0 : index
      %c112 = arith.constant 112 : index
      %164 = vector.load %arg2[%c0_45, %c0_46, %c112] : memref<1x4x256xf32, #tpu.memory_space<vmem>>, vector<1x4x144xf32>
      %165 = vector.shape_cast %164 : vector<1x4x144xf32> to vector<4x144xf32>
      %c1_47 = arith.constant 1 : index
      %c0_48 = arith.constant 0 : index
      %c0_49 = arith.constant 0 : index
      %166 = vector.load %arg8[%c1_47, %c0_48, %c0_49] : memref<2x4x256xf32, #tpu.memory_space<vmem>>, vector<1x4x144xf32>
      %167 = vector.shape_cast %166 : vector<1x4x144xf32> to vector<4x144xf32>
      %168 = vector.shape_cast %165 : vector<4x144xf32> to vector<1x4x144xf32>
      tpu.vector_store %arg8[%c1_47, %c0_48, %c0_49], %168 {strides = array<i32>} : memref<2x4x256xf32, #tpu.memory_space<vmem>>, vector<1x4x144xf32>,
    } else {
    }
    %3 = arith.index_cast %arg1 : i32 to index
    %c0 = arith.constant 0 : index
    %c0_1 = arith.constant 0 : index
    %4 = vector.load %arg8[%3, %c0, %c0_1] : memref<2x4x256xf32, #tpu.memory_space<vmem>>, vector<1x4x256xf32>
    %5 = vector.shape_cast %4 : vector<1x4x256xf32> to vector<4x256xf32>
    %6 = tpu.iota {dimensions = array<i32: 1>} : vector<1x128xi32>
    %c16_i32 = arith.constant 16 : i32
    %c0_i32_2 = arith.constant 0 : i32
    %7 = arith.cmpi eq, %c16_i32, %c0_i32_2 : i32
    %c1_i32 = arith.constant 1 : i32
    %8 = arith.select %7, %c1_i32, %c16_i32 : i32
    %9 = vector.broadcast %8 : i32 to vector<1x128xi32>
    %10 = arith.remsi %6, %9 : vector<1x128xi32>
    %c0_i32_3 = arith.constant 0 : i32
    %11 = vector.broadcast %c0_i32_3 : i32 to vector<1x128xi32>
    %12 = arith.cmpi ne, %10, %11 : vector<1x128xi32>
    %c0_i32_4 = arith.constant 0 : i32
    %13 = vector.broadcast %c0_i32_4 : i32 to vector<1x128xi32>
    %14 = arith.cmpi slt, %10, %13 : vector<1x128xi32>
    %c0_i32_5 = arith.constant 0 : i32
    %15 = arith.cmpi slt, %8, %c0_i32_5 : i32
    %16 = vector.broadcast %15 : i1 to vector<1x128xi1>
    %17 = vector.broadcast %16 : vector<1x128xi1> to vector<1x128xi1>
    %18 = arith.xori %14, %17 : vector<1x128xi1>
    %19 = arith.andi %18, %12 : vector<1x128xi1>
    %20 = vector.broadcast %8 : i32 to vector<1x128xi32>
    %21 = arith.addi %10, %20 : vector<1x128xi32>
    %22 = arith.select %19, %21, %10 : vector<1x128xi1>, vector<1x128xi32>
    %c0_i32_6 = arith.constant 0 : i32
    %23 = vector.broadcast %c0_i32_6 : i32 to vector<1x128xi32>
    %24 = arith.cmpi ne, %22, %23 : vector<1x128xi32>
    %c15_i32 = arith.constant 15 : i32
    %25 = vector.broadcast %c15_i32 : i32 to vector<1x128xi32>
    %26 = arith.cmpi ne, %22, %25 : vector<1x128xi32>
    %c0_7 = arith.constant 0 : index
    %c0_8 = arith.constant 0 : index
    %27 = vector.load %arg3[%c0_7, %c0_8] : memref<4x9xf32, #tpu.memory_space<vmem>>, vector<4x9xf32>
    %cst = arith.constant 0.000000e+00 : f32
    %28 = vector.broadcast %cst : f32 to vector<4x128xf32>
    %c1_i32_9 = arith.constant 1 : i32
    %29 = tpu.dynamic_rotate %5 by %c1_i32_9 dim 1 : vector<4x256xf32>, i32 -> vector<4x256xf32>
    %30 = vector.extract_strided_slice %29 {offsets = [0, 0], sizes = [4, 128], strides = [1, 1]} : vector<4x256xf32> to vector<4x128xf32>
    %cst_10 = arith.constant 0.000000e+00 : f32
    %31 = vector.shape_cast %24 : vector<1x128xi1> to vector<1x128xi1>
    %32 = vector.broadcast %31 : vector<1x128xi1> to vector<4x128xi1>
    %33 = vector.broadcast %cst_10 : f32 to vector<4x128xf32>
    %34 = arith.select %32, %30, %33 : vector<4x128xi1>, vector<4x128xf32>
    %35 = vector.extract_strided_slice %27 {offsets = [0, 0], sizes = [4, 1], strides = [1, 1]} : vector<4x9xf32> to vector<4x1xf32>
    %36 = vector.broadcast %35 : vector<4x1xf32> to vector<4x128xf32>
    %37 = arith.mulf %34, %36 : vector<4x128xf32>
    %38 = arith.addf %28, %37 : vector<4x128xf32>
    %c0_i32_11 = arith.constant 0 : i32
    %39 = tpu.dynamic_rotate %5 by %c0_i32_11 dim 1 : vector<4x256xf32>, i32 -> vector<4x256xf32>
    %40 = vector.extract_strided_slice %39 {offsets = [0, 0], sizes = [4, 128], strides = [1, 1]} : vector<4x256xf32> to vector<4x128xf32>
    %41 = vector.extract_strided_slice %27 {offsets = [0, 1], sizes = [4, 1], strides = [1, 1]} : vector<4x9xf32> to vector<4x1xf32>
    %42 = vector.broadcast %41 : vector<4x1xf32> to vector<4x128xf32>
    %43 = arith.mulf %40, %42 : vector<4x128xf32>
    %44 = arith.addf %38, %43 : vector<4x128xf32>
    %c255_i32 = arith.constant 255 : i32
    %45 = tpu.dynamic_rotate %5 by %c255_i32 dim 1 : vector<4x256xf32>, i32 -> vector<4x256xf32>
    %46 = vector.extract_strided_slice %45 {offsets = [0, 0], sizes = [4, 128], strides = [1, 1]} : vector<4x256xf32> to vector<4x128xf32>
    %cst_12 = arith.constant 0.000000e+00 : f32
    %47 = vector.shape_cast %26 : vector<1x128xi1> to vector<1x128xi1>
    %48 = vector.broadcast %47 : vector<1x128xi1> to vector<4x128xi1>
    %49 = vector.broadcast %cst_12 : f32 to vector<4x128xf32>
    %50 = arith.select %48, %46, %49 : vector<4x128xi1>, vector<4x128xf32>
    %51 = vector.extract_strided_slice %27 {offsets = [0, 2], sizes = [4, 1], strides = [1, 1]} : vector<4x9xf32> to vector<4x1xf32>
    %52 = vector.broadcast %51 : vector<4x1xf32> to vector<4x128xf32>
    %53 = arith.mulf %50, %52 : vector<4x128xf32>
    %54 = arith.addf %44, %53 : vector<4x128xf32>
    %c241_i32 = arith.constant 241 : i32
    %55 = tpu.dynamic_rotate %5 by %c241_i32 dim 1 : vector<4x256xf32>, i32 -> vector<4x256xf32>
    %56 = vector.extract_strided_slice %55 {offsets = [0, 0], sizes = [4, 128], strides = [1, 1]} : vector<4x256xf32> to vector<4x128xf32>
    %cst_13 = arith.constant 0.000000e+00 : f32
    %57 = vector.shape_cast %24 : vector<1x128xi1> to vector<1x128xi1>
    %58 = vector.broadcast %57 : vector<1x128xi1> to vector<4x128xi1>
    %59 = vector.broadcast %cst_13 : f32 to vector<4x128xf32>
    %60 = arith.select %58, %56, %59 : vector<4x128xi1>, vector<4x128xf32>
    %61 = vector.extract_strided_slice %27 {offsets = [0, 3], sizes = [4, 1], strides = [1, 1]} : vector<4x9xf32> to vector<4x1xf32>
    %62 = vector.broadcast %61 : vector<4x1xf32> to vector<4x128xf32>
    %63 = arith.mulf %60, %62 : vector<4x128xf32>
    %64 = arith.addf %54, %63 : vector<4x128xf32>
    %c240_i32 = arith.constant 240 : i32
    %65 = tpu.dynamic_rotate %5 by %c240_i32 dim 1 : vector<4x256xf32>, i32 -> vector<4x256xf32>
    %66 = vector.extract_strided_slice %65 {offsets = [0, 0], sizes = [4, 128], strides = [1, 1]} : vector<4x256xf32> to vector<4x128xf32>
    %67 = vector.extract_strided_slice %27 {offsets = [0, 4], sizes = [4, 1], strides = [1, 1]} : vector<4x9xf32> to vector<4x1xf32>
    %68 = vector.broadcast %67 : vector<4x1xf32> to vector<4x128xf32>
    %69 = arith.mulf %66, %68 : vector<4x128xf32>
    %70 = arith.addf %64, %69 : vector<4x128xf32>
    %c239_i32 = arith.constant 239 : i32
    %71 = tpu.dynamic_rotate %5 by %c239_i32 dim 1 : vector<4x256xf32>, i32 -> vector<4x256xf32>
    %72 = vector.extract_strided_slice %71 {offsets = [0, 0], sizes = [4, 128], strides = [1, 1]} : vector<4x256xf32> to vector<4x128xf32>
    %cst_14 = arith.constant 0.000000e+00 : f32
    %73 = vector.shape_cast %26 : vector<1x128xi1> to vector<1x128xi1>
    %74 = vector.broadcast %73 : vector<1x128xi1> to vector<4x128xi1>
    %75 = vector.broadcast %cst_14 : f32 to vector<4x128xf32>
    %76 = arith.select %74, %72, %75 : vector<4x128xi1>, vector<4x128xf32>
    %77 = vector.extract_strided_slice %27 {offsets = [0, 5], sizes = [4, 1], strides = [1, 1]} : vector<4x9xf32> to vector<4x1xf32>
    %78 = vector.broadcast %77 : vector<4x1xf32> to vector<4x128xf32>
    %79 = arith.mulf %76, %78 : vector<4x128xf32>
    %80 = arith.addf %70, %79 : vector<4x128xf32>
    %c225_i32 = arith.constant 225 : i32
    %81 = tpu.dynamic_rotate %5 by %c225_i32 dim 1 : vector<4x256xf32>, i32 -> vector<4x256xf32>
    %82 = vector.extract_strided_slice %81 {offsets = [0, 0], sizes = [4, 128], strides = [1, 1]} : vector<4x256xf32> to vector<4x128xf32>
    %cst_15 = arith.constant 0.000000e+00 : f32
    %83 = vector.shape_cast %24 : vector<1x128xi1> to vector<1x128xi1>
    %84 = vector.broadcast %83 : vector<1x128xi1> to vector<4x128xi1>
    %85 = vector.broadcast %cst_15 : f32 to vector<4x128xf32>
    %86 = arith.select %84, %82, %85 : vector<4x128xi1>, vector<4x128xf32>
    %87 = vector.extract_strided_slice %27 {offsets = [0, 6], sizes = [4, 1], strides = [1, 1]} : vector<4x9xf32> to vector<4x1xf32>
    %88 = vector.broadcast %87 : vector<4x1xf32> to vector<4x128xf32>
    %89 = arith.mulf %86, %88 : vector<4x128xf32>
    %90 = arith.addf %80, %89 : vector<4x128xf32>
    %c224_i32 = arith.constant 224 : i32
    %91 = tpu.dynamic_rotate %5 by %c224_i32 dim 1 : vector<4x256xf32>, i32 -> vector<4x256xf32>
    %92 = vector.extract_strided_slice %91 {offsets = [0, 0], sizes = [4, 128], strides = [1, 1]} : vector<4x256xf32> to vector<4x128xf32>
    %93 = vector.extract_strided_slice %27 {offsets = [0, 7], sizes = [4, 1], strides = [1, 1]} : vector<4x9xf32> to vector<4x1xf32>
    %94 = vector.broadcast %93 : vector<4x1xf32> to vector<4x128xf32>
    %95 = arith.mulf %92, %94 : vector<4x128xf32>
    %96 = arith.addf %90, %95 : vector<4x128xf32>
    %c223_i32 = arith.constant 223 : i32
    %97 = tpu.dynamic_rotate %5 by %c223_i32 dim 1 : vector<4x256xf32>, i32 -> vector<4x256xf32>
    %98 = vector.extract_strided_slice %97 {offsets = [0, 0], sizes = [4, 128], strides = [1, 1]} : vector<4x256xf32> to vector<4x128xf32>
    %cst_16 = arith.constant 0.000000e+00 : f32
    %99 = vector.shape_cast %26 : vector<1x128xi1> to vector<1x128xi1>
    %100 = vector.broadcast %99 : vector<1x128xi1> to vector<4x128xi1>
    %101 = vector.broadcast %cst_16 : f32 to vector<4x128xf32>
    %102 = arith.select %100, %98, %101 : vector<4x128xi1>, vector<4x128xf32>
    %103 = vector.extract_strided_slice %27 {offsets = [0, 8], sizes = [4, 1], strides = [1, 1]} : vector<4x9xf32> to vector<4x1xf32>
    %104 = vector.broadcast %103 : vector<4x1xf32> to vector<4x128xf32>
    %105 = arith.mulf %102, %104 : vector<4x128xf32>
    %106 = arith.addf %96, %105 : vector<4x128xf32>
    %c0_17 = arith.constant 0 : index
    %c0_18 = arith.constant 0 : index
    %107 = vector.load %arg4[%c0_17, %c0_18] : memref<4x1xf32, #tpu.memory_space<vmem>>, vector<4x1xf32>
    %108 = vector.broadcast %107 : vector<4x1xf32> to vector<4x128xf32>
    %109 = arith.addf %106, %108 : vector<4x128xf32>
    %cst_19 = arith.constant 0.000000e+00 : f32
    %110 = vector.broadcast %cst_19 : f32 to vector<4x128xf32>
    %111 = arith.maximumf %109, %110 : vector<4x128xf32>
    %c0_20 = arith.constant 0 : index
    %c0_21 = arith.constant 0 : index
    %112 = vector.load %arg5[%c0_20, %c0_21] : memref<8x4xf32, #tpu.memory_space<vmem>>, vector<8x4xf32>
    %c0_22 = arith.constant 0 : index
    %c0_23 = arith.constant 0 : index
    %113 = vector.load %arg6[%c0_22, %c0_23] : memref<8x1xf32, #tpu.memory_space<vmem>>, vector<8x1xf32>
    %114 = vector.shape_cast %113 : vector<8x1xf32> to vector<8x1xf32>
    %115 = vector.broadcast %114 : vector<8x1xf32> to vector<8x128xf32>
    %116 = vector.extract_strided_slice %112 {offsets = [0, 0], sizes = [8, 1], strides = [1, 1]} : vector<8x4xf32> to vector<8x1xf32>
    %117 = vector.extract_strided_slice %111 {offsets = [0, 0], sizes = [1, 128], strides = [1, 1]} : vector<4x128xf32> to vector<1x128xf32>
    %118 = vector.broadcast %116 : vector<8x1xf32> to vector<8x128xf32>
    %119 = vector.broadcast %117 : vector<1x128xf32> to vector<8x128xf32>
    %120 = arith.mulf %118, %119 : vector<8x128xf32>
    %121 = arith.addf %115, %120 : vector<8x128xf32>
    %122 = vector.extract_strided_slice %112 {offsets = [0, 1], sizes = [8, 1], strides = [1, 1]} : vector<8x4xf32> to vector<8x1xf32>
    %123 = vector.extract_strided_slice %111 {offsets = [1, 0], sizes = [1, 128], strides = [1, 1]} : vector<4x128xf32> to vector<1x128xf32>
    %124 = vector.broadcast %122 : vector<8x1xf32> to vector<8x128xf32>
    %125 = vector.broadcast %123 : vector<1x128xf32> to vector<8x128xf32>
    %126 = arith.mulf %124, %125 : vector<8x128xf32>
    %127 = arith.addf %121, %126 : vector<8x128xf32>
    %128 = vector.extract_strided_slice %112 {offsets = [0, 2], sizes = [8, 1], strides = [1, 1]} : vector<8x4xf32> to vector<8x1xf32>
    %129 = vector.extract_strided_slice %111 {offsets = [2, 0], sizes = [1, 128], strides = [1, 1]} : vector<4x128xf32> to vector<1x128xf32>
    %130 = vector.broadcast %128 : vector<8x1xf32> to vector<8x128xf32>
    %131 = vector.broadcast %129 : vector<1x128xf32> to vector<8x128xf32>
    %132 = arith.mulf %130, %131 : vector<8x128xf32>
    %133 = arith.addf %127, %132 : vector<8x128xf32>
    %134 = vector.extract_strided_slice %112 {offsets = [0, 3], sizes = [8, 1], strides = [1, 1]} : vector<8x4xf32> to vector<8x1xf32>
    %135 = vector.extract_strided_slice %111 {offsets = [3, 0], sizes = [1, 128], strides = [1, 1]} : vector<4x128xf32> to vector<1x128xf32>
    %136 = vector.broadcast %134 : vector<8x1xf32> to vector<8x128xf32>
    %137 = vector.broadcast %135 : vector<1x128xf32> to vector<8x128xf32>
    %138 = arith.mulf %136, %137 : vector<8x128xf32>
    %139 = arith.addf %133, %138 : vector<8x128xf32>
    %c0_24 = arith.constant 0 : index
    %c0_25 = arith.constant 0 : index
    %c0_26 = arith.constant 0 : index
    %140 = vector.load %arg7[%c0_24, %c0_25, %c0_26] : memref<1x8x128xf32, #tpu.memory_space<vmem>>, vector<1x8x128xf32>
    %141 = vector.shape_cast %140 : vector<1x8x128xf32> to vector<8x128xf32>
    %142 = vector.shape_cast %139 : vector<8x128xf32> to vector<1x8x128xf32>
    tpu.vector_store %arg7[%c0_24, %c0_25, %c0_26], %142 {strides = array<i32>} : memref<1x8x128xf32, #tpu.memory_space<vmem>>, vector<1x8x128xf32>,
    return
  }
  func.func @transform_0(%arg0: i32, %arg1: i32) -> (i32, i32, i32) {
    %c0_i32 = arith.constant 0 : i32
    %c0_i32_0 = arith.constant 0 : i32
    %c0_i32_1 = arith.constant 0 : i32
    return %arg0, %c0_i32, %c0_i32_0 : i32, i32, i32
  }
  func.func @transform_1(%arg0: i32, %arg1: i32) -> (i32, i32) {
    %c0_i32 = arith.constant 0 : i32
    %c0_i32_0 = arith.constant 0 : i32
    %c0_i32_1 = arith.constant 0 : i32
    return %c0_i32, %c0_i32_0 : i32, i32
  }
  func.func @transform_2(%arg0: i32, %arg1: i32) -> (i32, i32) {
    %c0_i32 = arith.constant 0 : i32
    %c0_i32_0 = arith.constant 0 : i32
    %c0_i32_1 = arith.constant 0 : i32
    return %c0_i32, %c0_i32_0 : i32, i32
  }
  func.func @transform_3(%arg0: i32, %arg1: i32) -> (i32, i32) {
    %c0_i32 = arith.constant 0 : i32
    %c0_i32_0 = arith.constant 0 : i32
    %c0_i32_1 = arith.constant 0 : i32
    return %c0_i32, %c0_i32_0 : i32, i32
  }
  func.func @transform_4(%arg0: i32, %arg1: i32) -> (i32, i32) {
    %c0_i32 = arith.constant 0 : i32
    %c0_i32_0 = arith.constant 0 : i32
    %c0_i32_1 = arith.constant 0 : i32
    return %c0_i32, %c0_i32_0 : i32, i32
  }
  func.func @transform_5(%arg0: i32, %arg1: i32) -> (i32, i32, i32) {
    %c0_i32 = arith.constant 0 : i32
    %c0_i32_0 = arith.constant 0 : i32
    return %arg0, %c0_i32, %arg1 : i32, i32, i32
  }
}

</mosaic_0001>

<llo_original>
// kernel: separable_conv.1
$region0: #{separable_conv.1}
  #allocation0 [shape = 'u32[]', space=smem, size = 0x4, offset = 0x4, fixed_abs, tag = 'smem constant byte address 0x4 - core index']
  #allocation1 [shape = 'u32[144,128]{1,0:T(1,128)}', space=vmem, size = 0x12000, scoped, tag = 'internal scratch']
  #allocation2 [shape = 'f32[2,4,256]{2,1,0:T(4,128)}', space=vmem, size = 0x2000, scoped, tag = 'scratch operand']
  %s0 = inlined_call_operand.vmem [shape: f32[2,4,256], index: 0, kind: input, shape index: {}]
  %s1 = inlined_call_operand.vmem [shape: f32[4,9], index: 1, kind: input, shape index: {}]
  %s2 = inlined_call_operand.vmem [shape: f32[4,1], index: 2, kind: input, shape index: {}]
  %s3 = inlined_call_operand.vmem [shape: f32[8,4], index: 3, kind: input, shape index: {}]
  %s4 = inlined_call_operand.vmem [shape: f32[8,1], index: 4, kind: input, shape index: {}]
  %s5 = inlined_call_operand.vmem [shape: f32[2,8,256], index: 5, kind: output, shape index: {}]
  %s6 = sld [smem:[#allocation0]]
  $region57: #{separable_conv.1} parent=0
    _
  %s8 = ssub.s32 1, %s6
  %s9 = scalar_select 0, %s8, %s6
  loop: start=0, step=1, limit=6
  $region2: #{separable_conv.1} parent=0 // loop_pre_header
    _
  $region3: #{separable_conv.1} parent=0 // loop_header
    %s11 = sphi 0, %s15
    %p12 = scmp.ge.s32.totalorder %s11, 6
    %s18 = sphi 0, %s30
    %s19 = sphi 0, %s26
    %s20 = sphi 0, %s18
    %s21 = sphi 0, %s19
    %s22 = sphi 0, %s20
    %s23 = sphi 0, %s21
    %s33 = sphi 0, %s35
    %s36 = sphi 0, %s33
    %s37 = sphi 0, %s36
    %s53 = sphi 0, %s37
    %s57 = sphi 0, %s57
    %s59 = sphi 0, %s57
    %s60 = sphi 0, %s59
    %s74 = sphi 0, %s60
    %s78 = sphi 0, %s78
    %s80 = sphi 0, %s78
    %s81 = sphi 0, %s80
    %s95 = sphi 0, %s81
    %s99 = sphi 0, %s99
    %s101 = sphi 0, %s99
    %s102 = sphi 0, %s101
    %s116 = sphi 0, %s102
    %s120 = sphi 0, %s120
    %s122 = sphi 0, %s120
    %s123 = sphi 0, %s122
    %s137 = sphi 0, %s123
    %s145 = sphi 0, %s147
    %s148 = sphi 0, %s145
    %s149 = sphi 0, %s148
    %s165 = sphi 0, %s149
  $region4: #{separable_conv.1} parent=0 // loop_header_branch
    %14 = sbr.rel (%p12) target = $region8
  $region5: #{separable_conv.1} parent=0 // loop_body
    %s16 = ssub.s32 %s11, 1
    %s17 = ssub.s32 %s11, 2
    %s24 = sadd.s32 1, %s19
    %p25 = scmp.ge.s32.totalorder %s24, 2
    %s26 = scalar_select %p25, 0, %s24
    %s27 = sadd.s32 1, %s18
    %s28 = scalar_select %p25, %s27, %s18
    %p29 = scmp.ge.s32.totalorder %s28, 2
    %s30 = scalar_select %p29, 0, %s28
    %s31 = ssub.s32 %s18, %s30
    %p32 = scmp.eq.s32.totalorder %s31, 0
    %s34 = sadd.s32 %s33, 1
    %s35 = scalar_select %p32, %s33, %s34
    %p38 = pneg %p32
    %p39 = scmp.eq.s32.totalorder %s11, 3
    %p40 = por %p38, %p39
    %p41 = scmp.ne.s32.totalorder %s33, %s36
    %p42 = scmp.eq.s32.totalorder %s11, 0
    %p43 = por %p41, %p42
    %p44 = scmp.ne.s32.totalorder %s33, %s36
    %p45 = scmp.eq.s32.totalorder %s16, 3
    %p46 = por %p44, %p45
    %p47 = scmp.ne.s32.totalorder %s36, %s37
    %p48 = scmp.eq.s32.totalorder %s16, 0
    %p49 = por %p47, %p48
    %p50 = scmp.ne.s32.totalorder %s36, %s37
    %p51 = scmp.eq.s32.totalorder %s17, 3
    %p52 = por %p50, %p51
    %p54 = scmp.ne.s32.totalorder %s37, %s53
    %p55 = scmp.eq.s32.totalorder %s17, 0
    %p56 = por %p54, %p55
    %s58 = sadd.s32 %s57, 1
    %p61 = scmp.eq.s32.totalorder %s11, 3
    %p62 = scmp.ne.s32.totalorder %s57, %s59
    %p63 = scmp.eq.s32.totalorder %s11, 0
    %p64 = por %p62, %p63
    %p65 = scmp.ne.s32.totalorder %s57, %s59
    %p66 = scmp.eq.s32.totalorder %s16, 3
    %p67 = por %p65, %p66
    %p68 = scmp.ne.s32.totalorder %s59, %s60
    %p69 = scmp.eq.s32.totalorder %s16, 0
    %p70 = por %p68, %p69
    %p71 = scmp.ne.s32.totalorder %s59, %s60
    %p72 = scmp.eq.s32.totalorder %s17, 3
    %p73 = por %p71, %p72
    %p75 = scmp.ne.s32.totalorder %s60, %s74
    %p76 = scmp.eq.s32.totalorder %s17, 0
    %p77 = por %p75, %p76
    %s79 = sadd.s32 %s78, 1
    %p82 = scmp.eq.s32.totalorder %s11, 3
    %p83 = scmp.ne.s32.totalorder %s78, %s80
    %p84 = scmp.eq.s32.totalorder %s11, 0
    %p85 = por %p83, %p84
    %p86 = scmp.ne.s32.totalorder %s78, %s80
    %p87 = scmp.eq.s32.totalorder %s16, 3
    %p88 = por %p86, %p87
    %p89 = scmp.ne.s32.totalorder %s80, %s81
    %p90 = scmp.eq.s32.totalorder %s16, 0
    %p91 = por %p89, %p90
    %p92 = scmp.ne.s32.totalorder %s80, %s81
    %p93 = scmp.eq.s32.totalorder %s17, 3
    %p94 = por %p92, %p93
    %p96 = scmp.ne.s32.totalorder %s81, %s95
    %p97 = scmp.eq.s32.totalorder %s17, 0
    %p98 = por %p96, %p97
    %s100 = sadd.s32 %s99, 1
    %p103 = scmp.eq.s32.totalorder %s11, 3
    %p104 = scmp.ne.s32.totalorder %s99, %s101
    %p105 = scmp.eq.s32.totalorder %s11, 0
    %p106 = por %p104, %p105
    %p107 = scmp.ne.s32.totalorder %s99, %s101
    %p108 = scmp.eq.s32.totalorder %s16, 3
    %p109 = por %p107, %p108
    %p110 = scmp.ne.s32.totalorder %s101, %s102
    %p111 = scmp.eq.s32.totalorder %s16, 0
    %p112 = por %p110, %p111
    %p113 = scmp.ne.s32.totalorder %s101, %s102
    %p114 = scmp.eq.s32.totalorder %s17, 3
    %p115 = por %p113, %p114
    %p117 = scmp.ne.s32.totalorder %s102, %s116
    %p118 = scmp.eq.s32.totalorder %s17, 0
    %p119 = por %p117, %p118
    %s121 = sadd.s32 %s120, 1
    %p124 = scmp.eq.s32.totalorder %s11, 3
    %p125 = scmp.ne.s32.totalorder %s120, %s122
    %p126 = scmp.eq.s32.totalorder %s11, 0
    %p127 = por %p125, %p126
    %p128 = scmp.ne.s32.totalorder %s120, %s122
    %p129 = scmp.eq.s32.totalorder %s16, 3
    %p130 = por %p128, %p129
    %p131 = scmp.ne.s32.totalorder %s122, %s123
    %p132 = scmp.eq.s32.totalorder %s16, 0
    %p133 = por %p131, %p132
    %p134 = scmp.ne.s32.totalorder %s122, %s123
    %p135 = scmp.eq.s32.totalorder %s17, 3
    %p136 = por %p134, %p135
    %p138 = scmp.ne.s32.totalorder %s123, %s137
    %p139 = scmp.eq.s32.totalorder %s17, 0
    %p140 = por %p138, %p139
    %s141 = ssub.s32 %s18, %s30
    %s142 = ssub.s32 %s19, %s26
    %s143 = sor.u32 %s141, %s142
    %p144 = scmp.eq.s32.totalorder %s143, 0
    %s146 = sadd.s32 %s145, 1
    %s147 = scalar_select %p144, %s145, %s146
    %p150 = pneg %p144
    %p151 = scmp.eq.s32.totalorder %s11, 3
    %p152 = por %p150, %p151
    %p153 = scmp.ne.s32.totalorder %s145, %s148
    %p154 = scmp.eq.s32.totalorder %s11, 0
    %p155 = por %p153, %p154
    %p156 = scmp.ne.s32.totalorder %s145, %s148
    %p157 = scmp.eq.s32.totalorder %s16, 3
    %p158 = por %p156, %p157
    %p159 = scmp.ne.s32.totalorder %s148, %s149
    %p160 = scmp.eq.s32.totalorder %s16, 0
    %p161 = por %p159, %p160
    %p162 = scmp.ne.s32.totalorder %s148, %s149
    %p163 = scmp.eq.s32.totalorder %s17, 3
    %p164 = por %p162, %p163
    %p166 = scmp.ne.s32.totalorder %s149, %s165
    %p167 = scmp.eq.s32.totalorder %s17, 0
    %p168 = por %p166, %p167
    %p169 = scmp.le.s32.totalorder 1, %s11
    %p170 = scmp.lt.s32.totalorder %s11, 5
    %p171 = pnand %p169, %p170
    %p172 = pneg %p171
    // Predicated region
    $region9: #{separable_conv.1} parent=5 // pred_check
      _
    $region10: #{separable_conv.1} parent=5 // pred_check_branch
      %174 = sbr.rel (%p171) target = $region12
    $region11: #{separable_conv.1} parent=5 // pred_region
      %s175 = ssub.s32 %s11, 1
      // Predicated region
      $region13: #{separable_conv.1} parent=11 // pred_check
        %p176 = pneg %p70
      $region14: #{separable_conv.1} parent=11 // pred_check_branch
        %178 = sbr.rel (%p176) target = $region16
      $region15: #{separable_conv.1} parent=11 // pred_region
        _
      $region16: #{separable_conv.1} parent=11 // pred_fallthru
        _
      // Predicated region
      $region17: #{separable_conv.1} parent=11 // pred_check
        %p179 = pneg %p91
      $region18: #{separable_conv.1} parent=11 // pred_check_branch
        %181 = sbr.rel (%p179) target = $region20
      $region19: #{separable_conv.1} parent=11 // pred_region
        _
      $region20: #{separable_conv.1} parent=11 // pred_fallthru
        _
      // Predicated region
      $region21: #{separable_conv.1} parent=11 // pred_check
        %p182 = pneg %p112
      $region22: #{separable_conv.1} parent=11 // pred_check_branch
        %184 = sbr.rel (%p182) target = $region24
      $region23: #{separable_conv.1} parent=11 // pred_region
        _
      $region24: #{separable_conv.1} parent=11 // pred_fallthru
        _
      // Predicated region
      $region25: #{separable_conv.1} parent=11 // pred_check
        %p185 = pneg %p133
      $region26: #{separable_conv.1} parent=11 // pred_check_branch
        %187 = sbr.rel (%p185) target = $region28
      $region27: #{separable_conv.1} parent=11 // pred_region
        _
      $region28: #{separable_conv.1} parent=11 // pred_fallthru
        _
    $region12: #{separable_conv.1} parent=5 // pred_fallthru
      _
    %p188 = scmp.lt.s32.totalorder %s11, 4
    // Predicated region
    $region29: #{separable_conv.1} parent=5 // pred_check
      %p189 = pneg %p188
    $region30: #{separable_conv.1} parent=5 // pred_check_branch
      %191 = sbr.rel (%p189) target = $region32
    $region31: #{separable_conv.1} parent=5 // pred_region
      // Predicated region
      $region33: #{separable_conv.1} parent=31 // pred_check
        %p192 = pneg %p43
      $region34: #{separable_conv.1} parent=31 // pred_check_branch
        %194 = sbr.rel (%p192) target = $region36
      $region35: #{separable_conv.1} parent=31 // pred_region
        %p195 = scmp.lt.s32.totalorder %s18, 1
        %s196 = scalar_select %p195, %s18, 1
        %s197 = smul.addr %s196, 2
        %s198 = smul.addr %s197, 4
        %s199 = scalar_lea.vmem %s0, %s198
      $region36: #{separable_conv.1} parent=31 // pred_fallthru
        _
    $region32: #{separable_conv.1} parent=5 // pred_fallthru
      _
    %p200 = scmp.le.s32.totalorder 1, %s11
    %p201 = scmp.lt.s32.totalorder %s11, 5
    %p202 = pnand %p200, %p201
    %p203 = pneg %p202
    // Predicated region
    $region37: #{separable_conv.1} parent=5 // pred_check
      _
    $region38: #{separable_conv.1} parent=5 // pred_check_branch
      %205 = sbr.rel (%p202) target = $region40
    $region39: #{separable_conv.1} parent=5 // pred_region
      %s206 = ssub.s32 %s11, 1
      %p207 = scmp.lt.s32.totalorder %s20, 1
      %s208 = scalar_select %p207, %s20, 1
      %s209 = smul.addr %s208, 2
      %s210 = smul.addr %s209, 4
      %s211 = scalar_lea.vmem %s0, %s210
      %p212 = pneg %p49
      %p213 = pneg %p46
      %p214 = pneg %p70
      %p215 = pneg %p67
      %p216 = pneg %p91
      %p217 = pneg %p88
      %p218 = pneg %p112
      %p219 = pneg %p109
      %p220 = pneg %p133
      %p221 = pneg %p130
      %p222 = pneg %p161
      %p223 = pneg %p158
      %p224 = scmp.lt.s32.totalorder %s20, 1
      %s225 = scalar_select %p224, %s20, 1
      %p226 = scmp.lt.s32.totalorder %s21, 1
      %s227 = scalar_select %p226, %s21, 1
      %s228 = smul.addr %s225, 2
      %s229 = sadd.s32 %s227, %s228
      %s230 = smul.addr %s229, 8
      %s231 = scalar_lea.vmem %s5, %s230
      %p232 = scmp.lt.s32.totalorder %s20, 1
      %s233 = scalar_select %p232, %s20, 1
      %s234 = smul.addr %s233, 2
      %s235 = smul.addr %s234, 4
      %s236 = scalar_lea.vmem %s0, %s235
      %p237 = scmp.lt.s32.totalorder %s20, 1
      %s238 = scalar_select %p237, %s20, 1
      %p239 = scmp.lt.s32.totalorder %s21, 1
      %s240 = scalar_select %p239, %s21, 1
      %s241 = smul.addr %s238, 2
      %s242 = sadd.s32 %s240, %s241
      %s243 = smul.addr %s242, 8
      %s244 = scalar_lea.vmem %s5, %s243
      %p245 = scmp.eq.s32.totalorder %s21, 0
      // Predicated region
      $region41: #{separable_conv.1} parent=39 // pred_check
        %p246 = pneg %p245
      $region42: #{separable_conv.1} parent=39 // pred_check_branch
        %248 = sbr.rel (%p246) target = $region44
      $region43: #{separable_conv.1} parent=39 // pred_region
        %vm249 = vcmask 125952
        %250 = vst.msk [vmem:[#allocation2] sm:$0xf] %vm249, 0.0
        %vm251 = vcmask 1043712
        %252 = vst.msk [vmem:[#allocation2 + $0x4] sm:$0xf] %vm251, 0.0
        %v253 = vld [vmem:[%s236] sm:$0xff]
        %255 = vrot.lane.b32.xlu0 %v253, 16
        %v256 = vpop.permute.xlu0 %255
        %v257 = vrot.slane %v256, 4
        %vm258 = vcmask 130048
        %v259 = vsel %vm258, %v257, %v256
        %vm261 = vcmask 1043584
        %vm262 = vcmask 261124
        %vm263 = vmor %vm262, %vm261
        %264 = vst.msk [vmem:[#allocation2] sm:$0xff] %vm263, %v259
        %s265 = scalar_lea.vmem [#allocation2], 8
        %vm266 = vcmask 257152
        %267 = vst.msk [vmem:[%s265 + $0x4] sm:$0xf] %vm266, 0.0
        %268 = vst.msk [vmem:[%s265 + $0x4] sm:$0xf] %vm251, 0.0
        %v269 = vld [vmem:[%s236] sm:$0xff]
        %271 = vrot.lane.b32.xlu0 %v269, 16
        %v272 = vpop.permute.xlu0 %271
        %v273 = vrot.slane %v272, 4
        %v274 = vsel %vm258, %v272, %v273
        %vm276 = vcmask 1043456
        %vm277 = vcmask 130052
        %vm278 = vmor %vm277, %vm276
        %279 = vst.msk [vmem:[%s265] sm:$0xff] %vm278, %v274
      $region44: #{separable_conv.1} parent=39 // pred_fallthru
        _
      %s280 = smul.u32 %s21, 2
      %s281 = smul.addr %s280, 4
      %s282 = scalar_lea.vmem [#allocation2], %s281
      %v283 = vld [vmem:[%s282] sm:$0xff]
      %v284 = vlaneseq
      %v285 = vand.u32 %v284, 127
      %vm286 = vcmp.lt.s32.totalorder %v285, 0
      %v287 = vsub.s32 0, %v285
      %v288 = vsel %vm286, %v287, %v285
      %v289 = vshrl.u32 %v288, 4
      %v290 = vand.u32 %v288, 15
      %v291 = vsub.s32 0, %v290
      %v292 = vsel %vm286, %v291, %v290
      %vm293 = vcmp.ne.s32.totalorder %v292, 0
      %vm294 = vcmp.lt.s32.totalorder %v292, 0
      %vm295 = vmand %vm294, %vm293
      %v296 = vadd.s32 %v292, 16
      %v297 = vsel %vm295, %v296, %v292
      %vm298 = vcmp.ne.s32.totalorder %v297, 0
      %vm299 = vcmp.ne.s32.totalorder %v297, 15
      %v300 = vld [vmem:[%s1] sm:$0xf]
      %v302 = vcombine.high %v283, %v283
      %304 = vrot.lane.b32.xlu0 %v283, 1
      %v305 = vpop.permute.xlu0 %304
      %306 = vrot.lane.b32.xlu0 %v302, 1
      %v307 = vpop.permute.xlu0 %306
      %vm308 = vcmp.lt.s32.totalorder %v285, 1
      %v309 = vsel %vm308, %v307, %v305
      %v310 = vsel %vm298, 1, 0
      %vm311 = vcmp.eq.s32.totalorder %v310, 1
      %v312 = vsel %vm311, %v309, 0.0
      %314 = vset.pattern.permute.xlu0 0
      %315 = vperm.xlu0 %314, %v300
      %v316 = vpop.permute.xlu0 %315
      %v318 = vmul.f32 %v312, %v316
      %v319 = vadd.f32 %v318, 0.0
      %320 = vset.pattern.permute.xlu0 1
      %321 = vperm.xlu0 %320, %v300
      %v322 = vpop.permute.xlu0 %321
      %v324 = vmul.f32 %v283, %v322
      %v325 = vadd.f32 %v319, %v324
      %326 = vrot.lane.b32.xlu0 %v283, 127
      %v327 = vpop.permute.xlu0 %326
      %328 = vrot.lane.b32.xlu0 %v302, 127
      %v329 = vpop.permute.xlu0 %328
      %vm330 = vcmp.lt.s32.totalorder %v285, 127
      %v331 = vsel %vm330, %v327, %v329
      %v332 = vsel %vm299, 1, 0
      %vm333 = vcmp.eq.s32.totalorder %v332, 1
      %v334 = vsel %vm333, %v331, 0.0
      %335 = vset.pattern.permute.xlu0 2
      %336 = vperm.xlu0 %335, %v300
      %v337 = vpop.permute.xlu0 %336
      %v339 = vmul.f32 %v334, %v337
      %v340 = vadd.f32 %v325, %v339
      %341 = vrot.lane.b32.xlu0 %v283, 113
      %v342 = vpop.permute.xlu0 %341
      %343 = vrot.lane.b32.xlu0 %v302, 113
      %v344 = vpop.permute.xlu0 %343
      %vm345 = vcmp.lt.s32.totalorder %v285, 113
      %v346 = vsel %vm345, %v342, %v344
      %v347 = vsel %vm311, %v346, 0.0
      %348 = vset.pattern.permute.xlu0 3
      %349 = vperm.xlu0 %348, %v300
      %v350 = vpop.permute.xlu0 %349
      %v352 = vmul.f32 %v347, %v350
      %v353 = vadd.f32 %v340, %v352
      %354 = vrot.lane.b32.xlu0 %v283, 112
      %v355 = vpop.permute.xlu0 %354
      %356 = vrot.lane.b32.xlu0 %v302, 112
      %v357 = vpop.permute.xlu0 %356
      %vm358 = vcmp.lt.s32.totalorder %v285, 112
      %v359 = vsel %vm358, %v355, %v357
      %360 = vset.pattern.permute.xlu0 4
      %361 = vperm.xlu0 %360, %v300
      %v362 = vpop.permute.xlu0 %361
      %v364 = vmul.f32 %v359, %v362
      %v365 = vadd.f32 %v353, %v364
      %366 = vrot.lane.b32.xlu0 %v283, 111
      %v367 = vpop.permute.xlu0 %366
      %368 = vrot.lane.b32.xlu0 %v302, 111
      %v369 = vpop.permute.xlu0 %368
      %vm370 = vcmp.lt.s32.totalorder %v285, 111
      %v371 = vsel %vm370, %v367, %v369
      %v372 = vsel %vm333, %v371, 0.0
      %373 = vset.pattern.permute.xlu0 5
      %374 = vperm.xlu0 %373, %v300
      %v375 = vpop.permute.xlu0 %374
      %v377 = vmul.f32 %v372, %v375
      %v378 = vadd.f32 %v365, %v377
      %379 = vrot.lane.b32.xlu0 %v283, 97
      %v380 = vpop.permute.xlu0 %379
      %381 = vrot.lane.b32.xlu0 %v302, 97
      %v382 = vpop.permute.xlu0 %381
      %vm383 = vcmp.lt.s32.totalorder %v285, 97
      %v384 = vsel %vm383, %v380, %v382
      %v385 = vsel %vm311, %v384, 0.0
      %386 = vset.pattern.permute.xlu0 6
      %387 = vperm.xlu0 %386, %v300
      %v388 = vpop.permute.xlu0 %387
      %v390 = vmul.f32 %v385, %v388
      %v391 = vadd.f32 %v378, %v390
      %392 = vrot.lane.b32.xlu0 %v283, 96
      %v393 = vpop.permute.xlu0 %392
      %394 = vrot.lane.b32.xlu0 %v302, 96
      %v395 = vpop.permute.xlu0 %394
      %vm396 = vcmp.lt.s32.totalorder %v285, 96
      %v397 = vsel %vm396, %v393, %v395
      %398 = vset.pattern.permute.xlu0 7
      %399 = vperm.xlu0 %398, %v300
      %v400 = vpop.permute.xlu0 %399
      %v402 = vmul.f32 %v397, %v400
      %v403 = vadd.f32 %v391, %v402
      %404 = vrot.lane.b32.xlu0 %v283, 95
      %v405 = vpop.permute.xlu0 %404
      %406 = vrot.lane.b32.xlu0 %v302, 95
      %v407 = vpop.permute.xlu0 %406
      %vm408 = vcmp.lt.s32.totalorder %v285, 95
      %v409 = vsel %vm408, %v405, %v407
      %v410 = vsel %vm333, %v409, 0.0
      %411 = vset.pattern.permute.xlu0 8
      %412 = vperm.xlu0 %411, %v300
      %v413 = vpop.permute.xlu0 %412
      %v415 = vmul.f32 %v410, %v413
      %v416 = vadd.f32 %v403, %v415
      %v417 = vld [vmem:[%s2] sm:$0xf]
      %419 = vset.pattern.permute.xlu0 0
      %420 = vperm.xlu0 %419, %v417
      %v421 = vpop.permute.xlu0 %420
      %v423 = vadd.f32 %v416, %v421
      %v424 = vmax.f32 %v423, 0.0
      %v425 = vld [vmem:[%s3] sm:$0xff]
      %v426 = vld [vmem:[%s4] sm:$0xff]
      %428 = vset.pattern.permute.xlu0 0
      %429 = vperm.xlu0 %428, %v426
      %v430 = vpop.permute.xlu0 %429
      %433 = vset.pattern.permute.xlu0 0
      %434 = vperm.xlu0 %433, %v425
      %v435 = vpop.permute.xlu0 %434
      %v437 = vlaneseq
      %v438 = vshrl.u32 %v437, 7
      %v439 = vsub.s32 0, %v438
      %v440 = vrot.slane %v424, %v439
      %v441 = vmul.f32 %v435, %v440
      %v442 = vadd.f32 %v430, %v441
      %443 = vset.pattern.permute.xlu0 1
      %444 = vperm.xlu0 %443, %v425
      %v445 = vpop.permute.xlu0 %444
      %v447 = vlaneseq
      %v448 = vshrl.u32 %v447, 7
      %v449 = vsub.s32 1, %v448
      %v450 = vrot.slane %v424, %v449
      %v451 = vmul.f32 %v445, %v450
      %v452 = vadd.f32 %v442, %v451
      %453 = vset.pattern.permute.xlu0 2
      %454 = vperm.xlu0 %453, %v425
      %v455 = vpop.permute.xlu0 %454
      %v457 = vlaneseq
      %v458 = vshrl.u32 %v457, 7
      %v459 = vsub.s32 2, %v458
      %v460 = vrot.slane %v424, %v459
      %v461 = vmul.f32 %v455, %v460
      %v462 = vadd.f32 %v452, %v461
      %463 = vset.pattern.permute.xlu0 3
      %464 = vperm.xlu0 %463, %v425
      %v465 = vpop.permute.xlu0 %464
      %v467 = vlaneseq
      %v468 = vshrl.u32 %v467, 7
      %v469 = vsub.s32 3, %v468
      %v470 = vrot.slane %v424, %v469
      %v471 = vmul.f32 %v465, %v470
      %v472 = vadd.f32 %v462, %v471
      %473 = vst [vmem:[%s244] sm:$0xff] %v472
      %p474 = scmp.lt.s32.totalorder %s20, 1
      %s475 = scalar_select %p474, %s20, 1
      %p476 = scmp.lt.s32.totalorder %s21, 1
      %s477 = scalar_select %p476, %s21, 1
      %s478 = smul.addr %s475, 2
      %s479 = sadd.s32 %s477, %s478
      %s480 = smul.addr %s479, 8
      %s481 = scalar_lea.vmem %s5, %s480
      // Predicated region
      $region45: #{separable_conv.1} parent=39 // pred_check
        %p482 = pneg %p158
      $region46: #{separable_conv.1} parent=39 // pred_check_branch
        %484 = sbr.rel (%p482) target = $region48
      $region47: #{separable_conv.1} parent=39 // pred_region
        _
      $region48: #{separable_conv.1} parent=39 // pred_fallthru
        _
    $region40: #{separable_conv.1} parent=5 // pred_fallthru
      _
    %p485 = scmp.le.s32.totalorder 2, %s11
    // Predicated region
    $region49: #{separable_conv.1} parent=5 // pred_check
      %p486 = pneg %p485
    $region50: #{separable_conv.1} parent=5 // pred_check_branch
      %488 = sbr.rel (%p486) target = $region52
    $region51: #{separable_conv.1} parent=5 // pred_region
      %s489 = ssub.s32 %s11, 2
      // Predicated region
      $region53: #{separable_conv.1} parent=51 // pred_check
        %p490 = pneg %p164
      $region54: #{separable_conv.1} parent=51 // pred_check_branch
        %492 = sbr.rel (%p490) target = $region56
      $region55: #{separable_conv.1} parent=51 // pred_region
        %p493 = scmp.lt.s32.totalorder %s22, 1
        %s494 = scalar_select %p493, %s22, 1
        %p495 = scmp.lt.s32.totalorder %s23, 1
        %s496 = scalar_select %p495, %s23, 1
        %s497 = smul.addr %s494, 2
        %s498 = sadd.s32 %s496, %s497
        %s499 = smul.addr %s498, 8
        %s500 = scalar_lea.vmem %s5, %s499
      $region56: #{separable_conv.1} parent=51 // pred_fallthru
        _
    $region52: #{separable_conv.1} parent=5 // pred_fallthru
      _
  $region6: #{separable_conv.1} parent=0 // loop_footer
    %s15 = sadd.s32 1, %s11
  $region7: #{separable_conv.1} parent=0 // loop_footer_branch
    %10 = sbr.rel target = $region3
  $region8: #{separable_conv.1} parent=0 // loop_exit
    _

</llo_original>
